<compile_context>
chip_gen: v7x
topology: tpu7x:2x2x1
jax: 0.10.0
libtpu: 0.0.40
codegen_flags: <defaults>
</compile_context>

<pallas_src>
import functools
import math

import jax
import jax.numpy as jnp
from jax.experimental import pallas as pl
from jax.experimental.pallas import tpu as pltpu

_PI = math.pi
_INV_PI = 1.0 / math.pi


def _cdiv(a, b):
    return -(-a // b)


def _round_up(x, m):
    return _cdiv(x, m) * m


def _device_kind():
    try:
        return jax.devices()[0].device_kind.lower()
    except Exception:
        return ""


def _sin_bf16(x_f32):
    """sin(x): f32 range reduction + bf16 odd polynomial (v6e/v7x bf16 VALUs).

    Range reduction must stay in f32: with scale=10 the matmul outputs are
    O(30-100) and bf16's 8-bit mantissa would destroy the reduced argument.
    Only the post-reduction polynomial (and the store) run in bf16.
    """
    k = jnp.floor(x_f32 * _INV_PI + 0.5)        # nearest integer to x/pi
    r = x_f32 - k * _PI                         # r in [-pi/2, pi/2]   (f32)
    parity = k - 2.0 * jnp.floor(k * 0.5)       # 0. or 1.
    sign = 1.0 - 2.0 * parity                   # (-1)^k
    rb = (r * sign).astype(jnp.bfloat16)        # sin is odd: fold sign into r
    r2 = rb * rb
    # Degree-7 odd minimax-style polynomial for sin on [-pi/2, pi/2].
    p = -1.83627e-4
    p = p * r2 + 8.30629e-3
    p = p * r2 + -1.6664824e-1
    p = p * r2 + 9.999966e-1
    return rb * p


def _ff_kernel(x_ref, b_ref, o_ref, *, sin_bf16):
    # (tile_m, K) @ (K, tile_n) -> f32 accumulate on the MXU, then sin on VPU/EUP.
    acc = jnp.dot(x_ref[...], b_ref[...], preferred_element_type=jnp.float32)
    y = _sin_bf16(acc) if sin_bf16 else jnp.sin(acc)
    o_ref[...] = y.astype(o_ref.dtype)


def fourier_features(x, B, *, tile_m=2048, tile_n=256, out_dtype=None,
                     sin_bf16=None, max_out_block_bytes=None,
                     vmem_limit_bytes=None):
    """y = sin(x @ B).  x: (..., input_dim), B: (input_dim, mapping_size).

    out_dtype=jnp.bfloat16 is strongly recommended when downstream tolerates
    it: this kernel is writeback-bound and bf16 halves the HBM traffic (and on
    v6e/v7x additionally enables the bf16 sin polynomial).  The default keeps
    the PyTorch semantics (out_dtype = x.dtype).
    """
    *lead, input_dim = x.shape
    k_dim, mapping_size = B.shape
    assert k_dim == input_dim, "B.shape[0] must equal trailing dim of x"
    out_dtype = x.dtype if out_dtype is None else jnp.dtype(out_dtype)
    out_itemsize = jnp.dtype(out_dtype).itemsize

    kind = _device_kind()
    is_v7 = "v7" in kind
    if vmem_limit_bytes is None:
        # v7x: 64 MiB physical VMEM per TC -> keep the scoped cap at 32 MiB.
        # v5e/v6e: 128 MiB physical -> 64 MiB cap (bigger, more efficient DMAs).
        vmem_limit_bytes = (32 if is_v7 else 64) * 1024 * 1024
    if max_out_block_bytes is None:
        # Double-buffered output stays <= half the cap; inputs are tiny.
        max_out_block_bytes = vmem_limit_bytes // 4
    if sin_bf16 is None:
        # bf16 VALUs exist on v6e/v7x only; only worth it when the output is bf16.
        sin_bf16 = bool(out_dtype == jnp.bfloat16) and ("v6" in kind or "v7" in kind)

    M = math.prod(lead) if lead else 1
    x2 = x.reshape(M, input_dim)
    m_pad8 = _round_up(M, 8)

    cost = pl.CostEstimate(
        flops=2 * M * input_dim * mapping_size,
        transcendentals=M * mapping_size,
        bytes_accessed=(
            M * input_dim * x2.dtype.itemsize
            + input_dim * mapping_size * B.dtype.itemsize
            + M * mapping_size * out_itemsize
        ),
    )
    kernel = functools.partial(_ff_kernel, sin_bf16=sin_bf16)

    # ---- full-width (lane-contiguous) output path ---------------------------
    # Preferred whenever a (tile_m, mapping_size) output block fits the budget;
    # shrink tile_m rather than splitting N (contiguous HBM writeback rows).
    tile_m_fw = (max_out_block_bytes // max(1, mapping_size * out_itemsize)) // 8 * 8
    tile_m_fw = min(tile_m_fw, tile_m, m_pad8)
    full_width = tile_m_fw >= min(128, m_pad8) and tile_m_fw >= 8

    if full_width:
        tm = tile_m_fw
        grid_m = _cdiv(m_pad8, tm)
        # Give the "tiny" case a grid too: a single-step call can't pipeline the
        # writeback behind compute and leaves v7x's second TensorCore idle.
        if grid_m == 1 and m_pad8 >= 256:
            tm = max(8, _round_up(_cdiv(m_pad8, 2), 8))
            grid_m = _cdiv(m_pad8, tm)
        m_pad = grid_m * tm
        x2p = jnp.pad(x2, ((0, m_pad - M), (0, 0))) if m_pad != M else x2

        out = pl.pallas_call(
            kernel,
            out_shape=jax.ShapeDtypeStruct((m_pad, mapping_size), out_dtype),
            grid_spec=pltpu.PrefetchScalarGridSpec(
                num_scalar_prefetch=0,
                grid=(grid_m,),
                in_specs=[
                    pl.BlockSpec((tm, input_dim), lambda m: (m, 0)),
                    # Constant block index -> B fetched once, stays VMEM-resident.
                    pl.BlockSpec((input_dim, mapping_size), lambda m: (0, 0)),
                ],
                out_specs=pl.BlockSpec((tm, mapping_size), lambda m: (m, 0)),
            ),
            cost_estimate=cost,
            compiler_params=pltpu.CompilerParams(
                dimension_semantics=("parallel",),
                vmem_limit_bytes=vmem_limit_bytes,
            ),
        )(x2p, B)
        out = out[:M] if m_pad != M else out
        return out.reshape(*lead, mapping_size)

    # ---- N-tiled path (mapping_size too wide for a full-width block) --------
    # Pad mapping_size to a multiple of tile_n so blocks stay bounded (guards
    # the VMEM blow-up for large, non-divisible mapping_size).
    tn = tile_n
    n_pad = _round_up(mapping_size, tn)
    tm = (max_out_block_bytes // (tn * out_itemsize)) // 8 * 8
    tm = max(8, min(tm, tile_m, m_pad8))
    grid_m = _cdiv(m_pad8, tm)
    m_pad = grid_m * tm

    x2p = jnp.pad(x2, ((0, m_pad - M), (0, 0))) if m_pad != M else x2
    Bp = (jnp.pad(B, ((0, 0), (0, n_pad - mapping_size)))
          if n_pad != mapping_size else B)

    out = pl.pallas_call(
        kernel,
        out_shape=jax.ShapeDtypeStruct((m_pad, n_pad), out_dtype),
        grid_spec=pltpu.PrefetchScalarGridSpec(
            num_scalar_prefetch=0,
            # N outer / M inner: B's block index only depends on the outer axis,
            # so each B tile is fetched once and stays resident across M steps.
            grid=(n_pad // tn, grid_m),
            in_specs=[
                pl.BlockSpec((tm, input_dim), lambda n, m: (m, 0)),
                pl.BlockSpec((input_dim, tn), lambda n, m: (0, n)),
            ],
            out_specs=pl.BlockSpec((tm, tn), lambda n, m: (m, n)),
        ),
        cost_estimate=cost,
        compiler_params=pltpu.CompilerParams(
            dimension_semantics=("parallel", "parallel"),
            vmem_limit_bytes=vmem_limit_bytes,
        ),
    )(x2p, Bp)
    out = out[:M, :mapping_size]
    return out.reshape(*lead, mapping_size)


def make_params(key, input_dim, mapping_size=256, scale=10.0, dtype=jnp.float32):
    # Deterministic stand-in for nn.Parameter(torch.randn(...) * scale)
    return jax.random.normal(key, (input_dim, mapping_size), dtype=dtype) * scale


if __name__ == "__main__":
    key = jax.random.PRNGKey(0)
    k_x1, k_x2, k_x3, k_b1, k_b2, k_b3 = jax.random.split(key, 6)

    # --- 1) tiny path (single-step grid): batch=2, seq=8, input_dim=4 ---
    batch, seq, input_dim = 2, 8, 4
    mapping_size, scale = 256, 10.0
    x_small = jax.random.normal(k_x1, (batch, seq, input_dim), dtype=jnp.float32)
    B_small = make_params(k_b1, input_dim, mapping_size, scale)

    y_small = fourier_features(x_small, B_small)
    jax.block_until_ready(y_small)
    y_small_ref = jnp.sin(x_small @ B_small)
    assert y_small.shape == (batch, seq, mapping_size)
    assert jnp.allclose(y_small, y_small_ref, atol=1e-4, rtol=1e-4)

    # --- 2) full-width tiled path: coordinate grid 1 x 64 x 64 x 2 (M = 4096) ---
    H = W = 64
    coord_dim = 2
    x_big = jax.random.normal(k_x2, (1, H, W, coord_dim), dtype=jnp.float32)
    B_big = make_params(k_b2, coord_dim, mapping_size, scale)

    y_big = fourier_features(x_big, B_big)
    jax.block_until_ready(y_big)
    y_big_ref = jnp.sin(x_big @ B_big)
    assert y_big.shape == (1, H, W, mapping_size)
    assert jnp.allclose(y_big, y_big_ref, atol=1e-4, rtol=1e-4)

    # --- 3) bf16 output (and bf16 sin polynomial on v6e/v7x): halves writeback ---
    y_bf16 = fourier_features(x_big, B_big, out_dtype=jnp.bfloat16)
    jax.block_until_ready(y_bf16)
    assert y_bf16.dtype == jnp.bfloat16
    assert float(jnp.max(jnp.abs(y_bf16.astype(jnp.float32) - y_big_ref))) < 6e-2

    # --- 4) forced N-tiled path, non-multiple-of-128 mapping_size (pads N) ---
    ms_odd = 384
    x_odd = jax.random.normal(k_x3, (4096, coord_dim), dtype=jnp.float32)
    B_odd = make_params(k_b3, coord_dim, ms_odd, scale)
    y_odd = fourier_features(x_odd, B_odd, max_out_block_bytes=64 * 1024)
    jax.block_until_ready(y_odd)
    assert y_odd.shape == (4096, ms_odd)
    assert jnp.allclose(y_odd, jnp.sin(x_odd @ B_odd), atol=1e-4, rtol=1e-4)

    print("KERNEL_OK")
</pallas_src>

<mosaic_0001>
module attributes {stable_mosaic.version = 11 : i64} {
  func.func @_ff_kernel(%arg0: i32, %arg1: memref<16x4xf32, #tpu.memory_space<vmem>>, %arg2: memref<4x256xf32, #tpu.memory_space<vmem>>, %arg3: memref<16x256xf32, #tpu.memory_space<vmem>>) attributes {dimension_semantics = [#tpu.dimension_semantics<parallel>], iteration_bounds = array<i64: 1>, scalar_prefetch = 0 : i64, scratch_operands = 0 : i64, tpu.core_type = #tpu.core_type<tc>, window_params = [{transform_indices = @transform_0, window_bounds = array<i64: 16, 4>}, {pipeline_mode = #tpu.pipeline_mode<synchronous>, transform_indices = @transform_1, window_bounds = array<i64: 4, 256>}, {transform_indices = @transform_2, window_bounds = array<i64: 16, 256>}]} {
    %c0 = arith.constant 0 : index
    %c0_0 = arith.constant 0 : index
    %0 = vector.load %arg1[%c0, %c0_0] : memref<16x4xf32, #tpu.memory_space<vmem>>, vector<16x4xf32>
    %c0_1 = arith.constant 0 : index
    %c0_2 = arith.constant 0 : index
    %1 = vector.load %arg2[%c0_1, %c0_2] : memref<4x256xf32, #tpu.memory_space<vmem>>, vector<4x256xf32>
    %cst = arith.constant dense<0.000000e+00> : vector<16x256xf32>
    %2 = tpu.matmul %0, %1, %cst {dimension_numbers = #tpu.dot_dimension_numbers<[1], [0], [0], [1], [0, 0, 1, 1], [], []>} : vector<16x4xf32>, vector<4x256xf32>, vector<16x256xf32> -> vector<16x256xf32>
    %3 = math.sin %2 : vector<16x256xf32>
    %c0_3 = arith.constant 0 : index
    %c0_4 = arith.constant 0 : index
    %4 = vector.load %arg3[%c0_3, %c0_4] : memref<16x256xf32, #tpu.memory_space<vmem>>, vector<16x256xf32>
    tpu.vector_store %arg3[%c0_3, %c0_4], %3 {strides = array<i32>} : memref<16x256xf32, #tpu.memory_space<vmem>>, vector<16x256xf32>,
    return
  }
  func.func @transform_0(%arg0: i32) -> (i32, i32) {
    %c0_i32 = arith.constant 0 : i32
    %c0_i32_0 = arith.constant 0 : i32
    return %arg0, %c0_i32 : i32, i32
  }
  func.func @transform_1(%arg0: i32) -> (i32, i32) {
    %c0_i32 = arith.constant 0 : i32
    %c0_i32_0 = arith.constant 0 : i32
    %c0_i32_1 = arith.constant 0 : i32
    return %c0_i32, %c0_i32_0 : i32, i32
  }
  func.func @transform_2(%arg0: i32) -> (i32, i32) {
    %c0_i32 = arith.constant 0 : i32
    %c0_i32_0 = arith.constant 0 : i32
    return %arg0, %c0_i32 : i32, i32
  }
}

</mosaic_0001>

<llo_original>
// kernel: tpu_custom_call.1
$region0: #{tpu_custom_call.1}
  #allocation0 [shape = 'u32[]', space=smem, size = 0x4, offset = 0x4, fixed_abs, tag = 'smem constant byte address 0x4 - core index']
  #allocation1 [shape = 'u32[144,128]{1,0:T(1,128)}', space=vmem, size = 0x12000, scoped, tag = 'internal scratch']
  %s0 = inlined_call_operand.hbm [shape: f32[16,4], index: 0, kind: input, shape index: {}]
  %s1 = inlined_call_operand.hbm [shape: f32[4,256], index: 1, kind: input, shape index: {}]
  %s2 = inlined_call_operand.hbm [shape: f32[16,256], index: 2, kind: output, shape index: {}]
  %s3 = sld [smem:[#allocation0]]
  $region26: #{tpu_custom_call.1} parent=0
    _
  %s5 = ssub.s32 1, %s3
  %s6 = scalar_select 0, %s5, %s3
  $region1: #{tpu_custom_call.1} parent=0
    #allocation2 [shape = 'u8[8192]{0}', space=vmem, size = 0x2000, scoped, tag = 'input window, operand 0, single buffered']
    #allocation3 [shape = 's32[1]{0}', space=sflag, size = 0x4, scoped, tag = 'scoped memory for tpu_custom_call.1']
    #allocation4 [shape = 's32[1]{0}', space=sflag, size = 0x4, scoped, tag = 'scoped memory for tpu_custom_call.1']
    #allocation5 [shape = 'u8[4096]{0}', space=vmem, size = 0x1000, scoped, tag = 'input window, operand 1, single buffered']
    #allocation6 [shape = 's32[1]{0}', space=sflag, size = 0x4, scoped, tag = 'scoped memory for tpu_custom_call.1']
    #allocation7 [shape = 'u8[16384]{0}', space=vmem, size = 0x4000, scoped, tag = 'output window, operand 0, single buffered']
    %7 = vsyncpa [#allocation3], 0
    %8 = vsyncpa [#allocation6], 0
    %9 = vsyncpa [#allocation4], 0
    // Predicated region
    $region2: #{tpu_custom_call.1} parent=1 // pred_check
      _
    $region3: #{tpu_custom_call.1} parent=1 // pred_check_branch
      %11 = sbr.rel (0) target = $region5
    $region4: #{tpu_custom_call.1} parent=1 // pred_region
      %s13 = ssub.s32 256, 256
      %14 = vsyncadd [#allocation3], %s13
      %s15 = sshll.u32 [#allocation2], 4
      %s16 = int_to_ptr.vmem [resolvable:$true] %s15
      %21 = dma.hbm_to_vmem [thread:$0]  %s0, 256, %s16, [#allocation3], 128, 128, 8
    $region5: #{tpu_custom_call.1} parent=1 // pred_fallthru
      _
    // Predicated region
    $region6: #{tpu_custom_call.1} parent=1 // pred_check
      _
    $region7: #{tpu_custom_call.1} parent=1 // pred_check_branch
      %23 = sbr.rel (0) target = $region9
    $region8: #{tpu_custom_call.1} parent=1 // pred_region
      %s25 = ssub.s32 128, 128
      %26 = vsyncadd [#allocation6], %s25
      %s28 = sshll.u32 [#allocation5], 4
      %s29 = int_to_ptr.vmem [resolvable:$true] %s28
      %31 = dma.hbm_to_vmem [thread:$0]  %s1, 128, %s29, [#allocation6]
    $region9: #{tpu_custom_call.1} parent=1 // pred_fallthru
      _
    // Predicated region
    $region10: #{tpu_custom_call.1} parent=1 // pred_check
      _
    $region11: #{tpu_custom_call.1} parent=1 // pred_check_branch
      %33 = sbr.rel (0) target = $region13
    $region12: #{tpu_custom_call.1} parent=1 // pred_region
      %34 = dma.done [#allocation3], 256
    $region13: #{tpu_custom_call.1} parent=1 // pred_fallthru
      _
    // Predicated region
    $region14: #{tpu_custom_call.1} parent=1 // pred_check
      _
    $region15: #{tpu_custom_call.1} parent=1 // pred_check_branch
      %36 = sbr.rel (0) target = $region17
    $region16: #{tpu_custom_call.1} parent=1 // pred_region
      %37 = dma.done [#allocation6], 128
    $region17: #{tpu_custom_call.1} parent=1 // pred_fallthru
      _
    %v38 = vld [vmem:[#allocation2] sm:$0xff]
    %v39 = vld [vmem:[#allocation2 + $0x8] sm:$0xff]
    %v40 = vld [vmem:[#allocation5] sm:$0xff]
    %v42 = vcombine.high %v40, %v40
    %vm43 = vcmask 31744
    %v45 = vsel %vm43, %v38, 0
    %v48 = vsel %vm43, %v39, 0
    %vm50 = vcmask 1043456
    %v51 = vsel %vm50, %v40, 0
    %v53 = vsel %vm50, %v42, 0
    %55 = vmatprep.subr.mxu0 %v53
    %56 = vmatpush1.msra.mxu0 %v51
    %57 = vmatprep.subr.mxu0 0.0
    %58 = vmatpush1.msra.mxu0 0.0
    %59 = vmatprep.subr.mxu0 0.0
    %60 = vmatpush1.msra.mxu0 0.0
    %61 = vmatprep.subr.mxu0 0.0
    %62 = vmatpush1.msra.mxu0 0.0
    %63 = vmatprep.subr.mxu0 0.0
    %64 = vmatpush1.msra.mxu0 0.0
    %65 = vmatprep.subr.mxu0 0.0
    %66 = vmatpush1.msra.mxu0 0.0
    %67 = vmatprep.subr.mxu0 0.0
    %68 = vmatpush1.msra.mxu0 0.0
    %69 = vmatprep.subr.mxu0 0.0
    %70 = vmatpush1.msra.mxu0 0.0
    %71 = vmatprep.subr.mxu0 0.0
    %72 = vmatpush1.msra.mxu0 0.0
    %73 = vmatprep.subr.mxu0 0.0
    %74 = vmatpush1.msra.mxu0 0.0
    %75 = vmatprep.subr.mxu0 0.0
    %76 = vmatpush1.msra.mxu0 0.0
    %77 = vmatprep.subr.mxu0 0.0
    %78 = vmatpush1.msra.mxu0 0.0
    %79 = vmatprep.subr.mxu0 0.0
    %80 = vmatpush1.msra.mxu0 0.0
    %81 = vmatprep.subr.mxu0 0.0
    %82 = vmatpush1.msra.mxu0 0.0
    %83 = vmatprep.subr.mxu0 0.0
    %84 = vmatpush1.msra.mxu0 0.0
    %85 = vmatprep.subr.mxu0 0.0
    %86 = vmatpush1.msra.mxu0 0.0
    %87 = vmatprep.subr.mxu0 0.0
    %88 = vmatpush1.msra.mxu0 0.0
    %89 = vmatprep.subr.mxu0 0.0
    %90 = vmatpush1.msra.mxu0 0.0
    %91 = vmatprep.subr.mxu0 0.0
    %92 = vmatpush1.msra.mxu0 0.0
    %93 = vmatprep.subr.mxu0 0.0
    %94 = vmatpush1.msra.mxu0 0.0
    %95 = vmatprep.subr.mxu0 0.0
    %96 = vmatpush1.msra.mxu0 0.0
    %97 = vmatprep.subr.mxu0 0.0
    %98 = vmatpush1.msra.mxu0 0.0
    %99 = vmatprep.subr.mxu0 0.0
    %100 = vmatpush1.msra.mxu0 0.0
    %101 = vmatprep.subr.mxu0 0.0
    %102 = vmatpush1.msra.mxu0 0.0
    %103 = vmatprep.subr.mxu0 0.0
    %104 = vmatpush1.msra.mxu0 0.0
    %105 = vmatprep.subr.mxu0 0.0
    %106 = vmatpush1.msra.mxu0 0.0
    %107 = vmatprep.subr.mxu0 0.0
    %108 = vmatpush1.msra.mxu0 0.0
    %109 = vmatprep.subr.mxu0 0.0
    %110 = vmatpush1.msra.mxu0 0.0
    %111 = vmatprep.subr.mxu0 0.0
    %112 = vmatpush1.msra.mxu0 0.0
    %113 = vmatprep.subr.mxu0 0.0
    %114 = vmatpush1.msra.mxu0 0.0
    %115 = vmatprep.subr.mxu0 0.0
    %116 = vmatpush1.msra.mxu0 0.0
    %117 = vmatprep.subr.mxu0 0.0
    %118 = vmatpush1.msra.mxu0 0.0
    %119 = vmatprep.mubr.f32.mxu0 0.0
    %120 = vmatmul.mubr.f32.gmra.mrb[0].mxu0 %v45
    %v121 = vpop.f32.mrb[0].mxu0
    %v122 = vadd.f32 0.0, %v121
    %v123 = vpop.f32.mrb[0].mxu0
    %v124 = vadd.f32 0.0, %v123
    %125 = vmatprep.mubr.f32.mxu0 0.0
    %126 = vmatmul.mubr.f32.gmra.mrb[0].mxu0 %v48
    %v127 = vpop.f32.mrb[0].mxu0
    %v128 = vadd.f32 0.0, %v127
    %v129 = vpop.f32.mrb[0].mxu0
    %v130 = vadd.f32 0.0, %v129
    %131 = vdwg.mxu0
    %v132 = vand.u32 2147483647, %v122
    %vm133 = vcmp.le.f32.partialorder %v132, 0.7853982
    %vm134 = vcmp.lt.s32.totalorder %v122, 0
    %v135 = vand.u32 %v122, 2139095040
    %v136 = vshrl.u32 %v135, 23
    %v137 = vsub.s32 %v136, 127
    %v138 = vand.u32 2147483647, %v122
    %v139 = vand.u32 %v138, 8388607
    %v140 = vor.u32 %v139, 8388608
    %v141 = vsub.s32 0, %v140
    %v142 = vadd.s32 %v137, 1
    %vm143 = vcmp.gt.s32.totalorder %v142, 0
    %v144 = vsel %vm143, %v142, 0
    %v145 = vshrl.u32 %v144, 5
    %v146 = vand.u32 %v144, 31
    %v147 = vsub.s32 32, %v146
    %v148 = vshrl.u32 683565275, %v147
    %v149 = vshll.u32 683565275, %v146
    %v150 = vshrl.u32 2475754826, %v147
    %v151 = vor.u32 %v149, %v150
    %v152 = vshll.u32 2475754826, %v146
    %v153 = vshrl.u32 2131351028, %v147
    %v154 = vor.u32 %v152, %v153
    %v155 = vshll.u32 2131351028, %v146
    %v156 = vshrl.u32 2102212464, %v147
    %v157 = vor.u32 %v155, %v156
    %v158 = vshll.u32 2102212464, %v146
    %v159 = vshrl.u32 920167782, %v147
    %v160 = vor.u32 %v158, %v159
    %v161 = vshll.u32 920167782, %v146
    %v162 = vshrl.u32 1326507024, %v147
    %v163 = vor.u32 %v161, %v162
    %vm164 = vcmp.lt.s32.totalorder %v145, 1
    %vm165 = vcmp.lt.s32.totalorder %v145, 2
    %vm166 = vcmp.lt.s32.totalorder %v145, 3
    %vm167 = vcmp.lt.s32.totalorder %v145, 4
    %v168 = vsel %vm164, %v148, %v151
    %v169 = vsel %vm167, %v157, 2102212464
    %v170 = vsel %vm166, %v154, %v169
    %v171 = vsel %vm165, %v168, %v170
    %v172 = vsel %vm164, %v151, %v154
    %v173 = vsel %vm167, %v160, 920167782
    %v174 = vsel %vm166, %v157, %v173
    %v175 = vsel %vm165, %v172, %v174
    %v176 = vsel %vm164, %v154, %v157
    %v177 = vsel %vm167, %v163, 1326507024
    %v178 = vsel %vm166, %v160, %v177
    %v179 = vsel %vm165, %v176, %v178
    %v180 = vshll.u32 %v140, 8
    %v181 = vmul.u32.u64.compose %v180, %v179
    %v182 = vextract.low.u32 %v181
    %v183 = vextract.high.u32 %v181
    %v184 = vmul.u32.u64.compose %v180, %v175
    %v185 = vextract.low.u32 %v184
    %v186 = vextract.high.u32 %v184
    %v187 = vmul.u32 %v180, %v171
    %v188 = vadd.s32 %v183, %v185
    %vm189 = vc.u32 %v183, %v185
    %v190 = vadd.s32 %v186, 1
    %v191 = vsel %vm189, %v190, %v186
    %v192 = vadd.s32 %v187, %v191
    %v193 = vadd.s32 %v192, 536870912
    %v194 = vshrl.u32 %v193, 30
    %v195 = vshll.u32 %v194, 30
    %v196 = vsub.s32 %v192, %v195
    %vm197 = vcmp.lt.s32.totalorder %v196, 0
    %v198 = vsub.s32 0, %v196
    %v199 = vsel %vm197, %v198, %v196
    %v200 = vclz %v199
    %v201 = vsub.s32 %v200, 2
    %vm202 = vcmp.gt.s32.totalorder 0, %v201
    %v203 = vsel %vm202, 0, %v201
    %v204 = vsub.s32 32, %v203
    %v205 = vshll.u32 %v196, %v203
    %v206 = vshrl.u32 %v188, %v204
    %v207 = vor.u32 %v205, %v206
    %v208 = vsub.s32 4294967266, %v203
    %v209 = vadd.s32 %v208, 127
    %v210 = vshll.u32 %v209, 23
    %v211 = vor.u32 4788187, %v210
    %v212 = vand.u32 2147483647, %v211
    %v214 = vcvt.s32.f32 %v207
    %v215 = vmul.f32 %v214, %v212
    %v216 = vxor.u32 %v215, 2147483648
    %v217 = vsel %vm134, %v216, %v215
    %v218 = vsub.s32 4, %v194
    %v219 = vsel %vm134, %v218, %v194
    %v220 = vsel %vm133, %v122, %v217
    %v221 = vsel %vm133, 0, %v219
    %v222 = vcosq.f32.pop %v220
    %v223 = vsinq.f32.pop %v220
    %vm224 = vweird.f32 %v122
    %v225 = vadd.s32 %v221, 3
    %v226 = vand.u32 %v225, 3
    %vm227 = vcmp.lt.s32.totalorder %v226, 2
    %vm228 = vcmp.eq.s32.totalorder %v226, 0
    %v229 = vxor.u32 %v223, 2147483648
    %v230 = vsel %vm228, %v222, %v229
    %vm231 = vcmp.eq.s32.totalorder %v226, 2
    %v232 = vxor.u32 %v222, 2147483648
    %v233 = vsel %vm231, %v232, %v223
    %v234 = vsel %vm227, %v230, %v233
    %v235 = vsel %vm224, nan, %v234
    %v236 = vand.u32 2147483647, %v124
    %vm237 = vcmp.le.f32.partialorder %v236, 0.7853982
    %vm238 = vcmp.lt.s32.totalorder %v124, 0
    %v239 = vand.u32 %v124, 2139095040
    %v240 = vshrl.u32 %v239, 23
    %v241 = vsub.s32 %v240, 127
    %v242 = vand.u32 2147483647, %v124
    %v243 = vand.u32 %v242, 8388607
    %v244 = vor.u32 %v243, 8388608
    %v245 = vsub.s32 0, %v244
    %v246 = vadd.s32 %v241, 1
    %vm247 = vcmp.gt.s32.totalorder %v246, 0
    %v248 = vsel %vm247, %v246, 0
    %v249 = vshrl.u32 %v248, 5
    %v250 = vand.u32 %v248, 31
    %v251 = vsub.s32 32, %v250
    %v252 = vshrl.u32 683565275, %v251
    %v253 = vshll.u32 683565275, %v250
    %v254 = vshrl.u32 2475754826, %v251
    %v255 = vor.u32 %v253, %v254
    %v256 = vshll.u32 2475754826, %v250
    %v257 = vshrl.u32 2131351028, %v251
    %v258 = vor.u32 %v256, %v257
    %v259 = vshll.u32 2131351028, %v250
    %v260 = vshrl.u32 2102212464, %v251
    %v261 = vor.u32 %v259, %v260
    %v262 = vshll.u32 2102212464, %v250
    %v263 = vshrl.u32 920167782, %v251
    %v264 = vor.u32 %v262, %v263
    %v265 = vshll.u32 920167782, %v250
    %v266 = vshrl.u32 1326507024, %v251
    %v267 = vor.u32 %v265, %v266
    %vm268 = vcmp.lt.s32.totalorder %v249, 1
    %vm269 = vcmp.lt.s32.totalorder %v249, 2
    %vm270 = vcmp.lt.s32.totalorder %v249, 3
    %vm271 = vcmp.lt.s32.totalorder %v249, 4
    %v272 = vsel %vm268, %v252, %v255
    %v273 = vsel %vm271, %v261, 2102212464
    %v274 = vsel %vm270, %v258, %v273
    %v275 = vsel %vm269, %v272, %v274
    %v276 = vsel %vm268, %v255, %v258
    %v277 = vsel %vm271, %v264, 920167782
    %v278 = vsel %vm270, %v261, %v277
    %v279 = vsel %vm269, %v276, %v278
    %v280 = vsel %vm268, %v258, %v261
    %v281 = vsel %vm271, %v267, 1326507024
    %v282 = vsel %vm270, %v264, %v281
    %v283 = vsel %vm269, %v280, %v282
    %v284 = vshll.u32 %v244, 8
    %v285 = vmul.u32.u64.compose %v284, %v283
    %v286 = vextract.low.u32 %v285
    %v287 = vextract.high.u32 %v285
    %v288 = vmul.u32.u64.compose %v284, %v279
    %v289 = vextract.low.u32 %v288
    %v290 = vextract.high.u32 %v288
    %v291 = vmul.u32 %v284, %v275
    %v292 = vadd.s32 %v287, %v289
    %vm293 = vc.u32 %v287, %v289
    %v294 = vadd.s32 %v290, 1
    %v295 = vsel %vm293, %v294, %v290
    %v296 = vadd.s32 %v291, %v295
    %v297 = vadd.s32 %v296, 536870912
    %v298 = vshrl.u32 %v297, 30
    %v299 = vshll.u32 %v298, 30
    %v300 = vsub.s32 %v296, %v299
    %vm301 = vcmp.lt.s32.totalorder %v300, 0
    %v302 = vsub.s32 0, %v300
    %v303 = vsel %vm301, %v302, %v300
    %v304 = vclz %v303
    %v305 = vsub.s32 %v304, 2
    %vm306 = vcmp.gt.s32.totalorder 0, %v305
    %v307 = vsel %vm306, 0, %v305
    %v308 = vsub.s32 32, %v307
    %v309 = vshll.u32 %v300, %v307
    %v310 = vshrl.u32 %v292, %v308
    %v311 = vor.u32 %v309, %v310
    %v312 = vsub.s32 4294967266, %v307
    %v313 = vadd.s32 %v312, 127
    %v314 = vshll.u32 %v313, 23
    %v315 = vor.u32 4788187, %v314
    %v316 = vand.u32 2147483647, %v315
    %v318 = vcvt.s32.f32 %v311
    %v319 = vmul.f32 %v318, %v316
    %v320 = vxor.u32 %v319, 2147483648
    %v321 = vsel %vm238, %v320, %v319
    %v322 = vsub.s32 4, %v298
    %v323 = vsel %vm238, %v322, %v298
    %v324 = vsel %vm237, %v124, %v321
    %v325 = vsel %vm237, 0, %v323
    %v326 = vcosq.f32.pop %v324
    %v327 = vsinq.f32.pop %v324
    %vm328 = vweird.f32 %v124
    %v329 = vadd.s32 %v325, 3
    %v330 = vand.u32 %v329, 3
    %vm331 = vcmp.lt.s32.totalorder %v330, 2
    %vm332 = vcmp.eq.s32.totalorder %v330, 0
    %v333 = vxor.u32 %v327, 2147483648
    %v334 = vsel %vm332, %v326, %v333
    %vm335 = vcmp.eq.s32.totalorder %v330, 2
    %v336 = vxor.u32 %v326, 2147483648
    %v337 = vsel %vm335, %v336, %v327
    %v338 = vsel %vm331, %v334, %v337
    %v339 = vsel %vm328, nan, %v338
    %v340 = vand.u32 2147483647, %v128
    %vm341 = vcmp.le.f32.partialorder %v340, 0.7853982
    %vm342 = vcmp.lt.s32.totalorder %v128, 0
    %v343 = vand.u32 %v128, 2139095040
    %v344 = vshrl.u32 %v343, 23
    %v345 = vsub.s32 %v344, 127
    %v346 = vand.u32 2147483647, %v128
    %v347 = vand.u32 %v346, 8388607
    %v348 = vor.u32 %v347, 8388608
    %v349 = vsub.s32 0, %v348
    %v350 = vadd.s32 %v345, 1
    %vm351 = vcmp.gt.s32.totalorder %v350, 0
    %v352 = vsel %vm351, %v350, 0
    %v353 = vshrl.u32 %v352, 5
    %v354 = vand.u32 %v352, 31
    %v355 = vsub.s32 32, %v354
    %v356 = vshrl.u32 683565275, %v355
    %v357 = vshll.u32 683565275, %v354
    %v358 = vshrl.u32 2475754826, %v355
    %v359 = vor.u32 %v357, %v358
    %v360 = vshll.u32 2475754826, %v354
    %v361 = vshrl.u32 2131351028, %v355
    %v362 = vor.u32 %v360, %v361
    %v363 = vshll.u32 2131351028, %v354
    %v364 = vshrl.u32 2102212464, %v355
    %v365 = vor.u32 %v363, %v364
    %v366 = vshll.u32 2102212464, %v354
    %v367 = vshrl.u32 920167782, %v355
    %v368 = vor.u32 %v366, %v367
    %v369 = vshll.u32 920167782, %v354
    %v370 = vshrl.u32 1326507024, %v355
    %v371 = vor.u32 %v369, %v370
    %vm372 = vcmp.lt.s32.totalorder %v353, 1
    %vm373 = vcmp.lt.s32.totalorder %v353, 2
    %vm374 = vcmp.lt.s32.totalorder %v353, 3
    %vm375 = vcmp.lt.s32.totalorder %v353, 4
    %v376 = vsel %vm372, %v356, %v359
    %v377 = vsel %vm375, %v365, 2102212464
    %v378 = vsel %vm374, %v362, %v377
    %v379 = vsel %vm373, %v376, %v378
    %v380 = vsel %vm372, %v359, %v362
    %v381 = vsel %vm375, %v368, 920167782
    %v382 = vsel %vm374, %v365, %v381
    %v383 = vsel %vm373, %v380, %v382
    %v384 = vsel %vm372, %v362, %v365
    %v385 = vsel %vm375, %v371, 1326507024
    %v386 = vsel %vm374, %v368, %v385
    %v387 = vsel %vm373, %v384, %v386
    %v388 = vshll.u32 %v348, 8
    %v389 = vmul.u32.u64.compose %v388, %v387
    %v390 = vextract.low.u32 %v389
    %v391 = vextract.high.u32 %v389
    %v392 = vmul.u32.u64.compose %v388, %v383
    %v393 = vextract.low.u32 %v392
    %v394 = vextract.high.u32 %v392
    %v395 = vmul.u32 %v388, %v379
    %v396 = vadd.s32 %v391, %v393
    %vm397 = vc.u32 %v391, %v393
    %v398 = vadd.s32 %v394, 1
    %v399 = vsel %vm397, %v398, %v394
    %v400 = vadd.s32 %v395, %v399
    %v401 = vadd.s32 %v400, 536870912
    %v402 = vshrl.u32 %v401, 30
    %v403 = vshll.u32 %v402, 30
    %v404 = vsub.s32 %v400, %v403
    %vm405 = vcmp.lt.s32.totalorder %v404, 0
    %v406 = vsub.s32 0, %v404
    %v407 = vsel %vm405, %v406, %v404
    %v408 = vclz %v407
    %v409 = vsub.s32 %v408, 2
    %vm410 = vcmp.gt.s32.totalorder 0, %v409
    %v411 = vsel %vm410, 0, %v409
    %v412 = vsub.s32 32, %v411
    %v413 = vshll.u32 %v404, %v411
    %v414 = vshrl.u32 %v396, %v412
    %v415 = vor.u32 %v413, %v414
    %v416 = vsub.s32 4294967266, %v411
    %v417 = vadd.s32 %v416, 127
    %v418 = vshll.u32 %v417, 23
    %v419 = vor.u32 4788187, %v418
    %v420 = vand.u32 2147483647, %v419
    %v422 = vcvt.s32.f32 %v415
    %v423 = vmul.f32 %v422, %v420
    %v424 = vxor.u32 %v423, 2147483648
    %v425 = vsel %vm342, %v424, %v423
    %v426 = vsub.s32 4, %v402
    %v427 = vsel %vm342, %v426, %v402
    %v428 = vsel %vm341, %v128, %v425
    %v429 = vsel %vm341, 0, %v427
    %v430 = vcosq.f32.pop %v428
    %v431 = vsinq.f32.pop %v428
    %vm432 = vweird.f32 %v128
    %v433 = vadd.s32 %v429, 3
    %v434 = vand.u32 %v433, 3
    %vm435 = vcmp.lt.s32.totalorder %v434, 2
    %vm436 = vcmp.eq.s32.totalorder %v434, 0
    %v437 = vxor.u32 %v431, 2147483648
    %v438 = vsel %vm436, %v430, %v437
    %vm439 = vcmp.eq.s32.totalorder %v434, 2
    %v440 = vxor.u32 %v430, 2147483648
    %v441 = vsel %vm439, %v440, %v431
    %v442 = vsel %vm435, %v438, %v441
    %v443 = vsel %vm432, nan, %v442
    %v444 = vand.u32 2147483647, %v130
    %vm445 = vcmp.le.f32.partialorder %v444, 0.7853982
    %vm446 = vcmp.lt.s32.totalorder %v130, 0
    %v447 = vand.u32 %v130, 2139095040
    %v448 = vshrl.u32 %v447, 23
    %v449 = vsub.s32 %v448, 127
    %v450 = vand.u32 2147483647, %v130
    %v451 = vand.u32 %v450, 8388607
    %v452 = vor.u32 %v451, 8388608
    %v453 = vsub.s32 0, %v452
    %v454 = vadd.s32 %v449, 1
    %vm455 = vcmp.gt.s32.totalorder %v454, 0
    %v456 = vsel %vm455, %v454, 0
    %v457 = vshrl.u32 %v456, 5
    %v458 = vand.u32 %v456, 31
    %v459 = vsub.s32 32, %v458
    %v460 = vshrl.u32 683565275, %v459
    %v461 = vshll.u32 683565275, %v458
    %v462 = vshrl.u32 2475754826, %v459
    %v463 = vor.u32 %v461, %v462
    %v464 = vshll.u32 2475754826, %v458
    %v465 = vshrl.u32 2131351028, %v459
    %v466 = vor.u32 %v464, %v465
    %v467 = vshll.u32 2131351028, %v458
    %v468 = vshrl.u32 2102212464, %v459
    %v469 = vor.u32 %v467, %v468
    %v470 = vshll.u32 2102212464, %v458
    %v471 = vshrl.u32 920167782, %v459
    %v472 = vor.u32 %v470, %v471
    %v473 = vshll.u32 920167782, %v458
    %v474 = vshrl.u32 1326507024, %v459
    %v475 = vor.u32 %v473, %v474
    %vm476 = vcmp.lt.s32.totalorder %v457, 1
    %vm477 = vcmp.lt.s32.totalorder %v457, 2
    %vm478 = vcmp.lt.s32.totalorder %v457, 3
    %vm479 = vcmp.lt.s32.totalorder %v457, 4
    %v480 = vsel %vm476, %v460, %v463
    %v481 = vsel %vm479, %v469, 2102212464
    %v482 = vsel %vm478, %v466, %v481
    %v483 = vsel %vm477, %v480, %v482
    %v484 = vsel %vm476, %v463, %v466
    %v485 = vsel %vm479, %v472, 920167782
    %v486 = vsel %vm478, %v469, %v485
    %v487 = vsel %vm477, %v484, %v486
    %v488 = vsel %vm476, %v466, %v469
    %v489 = vsel %vm479, %v475, 1326507024
    %v490 = vsel %vm478, %v472, %v489
    %v491 = vsel %vm477, %v488, %v490
    %v492 = vshll.u32 %v452, 8
    %v493 = vmul.u32.u64.compose %v492, %v491
    %v494 = vextract.low.u32 %v493
    %v495 = vextract.high.u32 %v493
    %v496 = vmul.u32.u64.compose %v492, %v487
    %v497 = vextract.low.u32 %v496
    %v498 = vextract.high.u32 %v496
    %v499 = vmul.u32 %v492, %v483
    %v500 = vadd.s32 %v495, %v497
    %vm501 = vc.u32 %v495, %v497
    %v502 = vadd.s32 %v498, 1
    %v503 = vsel %vm501, %v502, %v498
    %v504 = vadd.s32 %v499, %v503
    %v505 = vadd.s32 %v504, 536870912
    %v506 = vshrl.u32 %v505, 30
    %v507 = vshll.u32 %v506, 30
    %v508 = vsub.s32 %v504, %v507
    %vm509 = vcmp.lt.s32.totalorder %v508, 0
    %v510 = vsub.s32 0, %v508
    %v511 = vsel %vm509, %v510, %v508
    %v512 = vclz %v511
    %v513 = vsub.s32 %v512, 2
    %vm514 = vcmp.gt.s32.totalorder 0, %v513
    %v515 = vsel %vm514, 0, %v513
    %v516 = vsub.s32 32, %v515
    %v517 = vshll.u32 %v508, %v515
    %v518 = vshrl.u32 %v500, %v516
    %v519 = vor.u32 %v517, %v518
    %v520 = vsub.s32 4294967266, %v515
    %v521 = vadd.s32 %v520, 127
    %v522 = vshll.u32 %v521, 23
    %v523 = vor.u32 4788187, %v522
    %v524 = vand.u32 2147483647, %v523
    %v526 = vcvt.s32.f32 %v519
    %v527 = vmul.f32 %v526, %v524
    %v528 = vxor.u32 %v527, 2147483648
    %v529 = vsel %vm446, %v528, %v527
    %v530 = vsub.s32 4, %v506
    %v531 = vsel %vm446, %v530, %v506
    %v532 = vsel %vm445, %v130, %v529
    %v533 = vsel %vm445, 0, %v531
    %v534 = vcosq.f32.pop %v532
    %v535 = vsinq.f32.pop %v532
    %vm536 = vweird.f32 %v130
    %v537 = vadd.s32 %v533, 3
    %v538 = vand.u32 %v537, 3
    %vm539 = vcmp.lt.s32.totalorder %v538, 2
    %vm540 = vcmp.eq.s32.totalorder %v538, 0
    %v541 = vxor.u32 %v535, 2147483648
    %v542 = vsel %vm540, %v534, %v541
    %vm543 = vcmp.eq.s32.totalorder %v538, 2
    %v544 = vxor.u32 %v534, 2147483648
    %v545 = vsel %vm543, %v544, %v535
    %v546 = vsel %vm539, %v542, %v545
    %v547 = vsel %vm536, nan, %v546
    %548 = vst [vmem:[#allocation7] sm:$0xff] %v235
    %549 = vst [vmem:[#allocation7 + $0x8] sm:$0xff] %v339
    %550 = vst [vmem:[#allocation7 + $0x10] sm:$0xff] %v443
    %551 = vst [vmem:[#allocation7 + $0x18] sm:$0xff] %v547
    // Predicated region
    $region18: #{tpu_custom_call.1} parent=1 // pred_check
      _
    $region19: #{tpu_custom_call.1} parent=1 // pred_check_branch
      %553 = sbr.rel (0) target = $region21
    $region20: #{tpu_custom_call.1} parent=1 // pred_region
      %s555 = ssub.s32 512, 512
      %556 = vsyncadd [#allocation4], %s555
      %s557 = sshll.u32 [#allocation7], 4
      %s558 = int_to_ptr.vmem [resolvable:$true] %s557
      %563 = dma.vmem_to_hbm [thread:$0]  %s558, 512, %s2, [#allocation4], 256, 256, 16
    $region21: #{tpu_custom_call.1} parent=1 // pred_fallthru
      _
    // Predicated region
    $region22: #{tpu_custom_call.1} parent=1 // pred_check
      _
    $region23: #{tpu_custom_call.1} parent=1 // pred_check_branch
      %565 = sbr.rel (0) target = $region25
    $region24: #{tpu_custom_call.1} parent=1 // pred_region
      %566 = dma.done [#allocation4], 512
    $region25: #{tpu_custom_call.1} parent=1 // pred_fallthru
      _
    %567 = vsyncpa [#allocation3], 1
    %568 = vsyncpa [#allocation6], 1
    %569 = vsyncpa [#allocation4], 1

</llo_original>
